<compile_context>
chip_gen: v5e
topology: v5e:2x2
jax: 0.10.0
libtpu: 0.0.40
codegen_flags: <defaults>
</compile_context>

<pallas_src>
import jax
import jax.numpy as jnp
import numpy as np
from jax.experimental import pallas as pl
from jax.experimental.pallas import tpu as pltpu

KSIZE = 7
PAD = (KSIZE - 1) // 2


def _round_up(n, m):
    return ((n + m - 1) // m) * m


# ---------------------------------------------------------------------------
# One-time pltpu.roll direction probe.  The conv taps need t[i + k - PAD] at
# lane i; this pins the rotation sign so the result is correct regardless of
# the tpu.dynamic_rotate convention.
# ---------------------------------------------------------------------------
_ROLL_SIGN = None


def _probe_roll_kernel(x_ref, o_ref):
    o_ref[...] = pltpu.roll(x_ref[...], 1, axis=1)


def _roll_sign():
    global _ROLL_SIGN
    if _ROLL_SIGN is None:
        x = jnp.broadcast_to(jax.lax.iota(jnp.float32, 128)[None, :], (8, 128))
        y = pl.pallas_call(
            _probe_roll_kernel,
            out_shape=jax.ShapeDtypeStruct((8, 128), jnp.float32),
        )(x)
        # np.roll convention: out[i] = in[i - shift]  ->  out[0, 0] == 127.
        _ROLL_SIGN = 1 if float(y[0, 0]) == 127.0 else -1
    return _ROLL_SIGN


def _pick_channel_tile(C, HW, itemsize, target_bytes=1 << 20):
    """Channel tile: divides C, is a multiple of 8 (BlockSpec rule) unless it
    equals C, and aims for ~1 MiB input blocks (near HBM-roofline block size
    while keeping the double-buffered working set small for v7x's VMEM)."""
    if C * HW * itemsize <= 2 * target_bytes:
        return C
    divisors = [d for d in range(8, C, 8) if C % d == 0]
    for d in divisors:                       # ascending; smallest >= target
        if d * HW * itemsize >= target_bytes:
            return d
    return divisors[-1] if divisors else C


def _make_iia_kernel(TC, H, W, roll_sign, out_dtype):
    HW = H * W
    LP_H = _round_up(H + PAD, 128)           # 128-aligned slab for the conv
    LP_W = _round_up(W + PAD, 128)

    def iia_kernel(x_ref, c1_ref, kw_ref, scale_ref, shift_ref, out_ref):
        # x block: (1, TC, H*W), lane-dense.  Compute in f32 in-register.
        x2 = x_ref[0].astype(jnp.float32)              # (TC, HW)
        w0 = c1_ref[0]                                 # conv1 weight for max
        w1 = c1_ref[1]                                 # conv1 weight for mean
        bc = c1_ref[2]                                 # conv1 bias
        kw = kw_ref[...]                               # (TC, KSIZE) conv2 taps
        scale = scale_ref[...]                         # (TC, 1) folded BN scale
        shift = shift_ref[...]                         # (TC, 1) folded BN shift

        # ---- segmented reductions directly on the flat (TC, H*W) layout ----
        # per-(c,h) reduce over w -> (TC, H); per-(c,w) reduce over h -> (TC, W)
        mh_cols, sh_cols = [], []
        m_w, s_w = None, None
        for h in range(H):
            seg = x2[:, h * W:(h + 1) * W]             # (TC, W) static slice
            mh_cols.append(jnp.max(seg, axis=1, keepdims=True))
            sh_cols.append(jnp.sum(seg, axis=1, keepdims=True))
            m_w = seg if m_w is None else jnp.maximum(m_w, seg)
            s_w = seg if s_w is None else s_w + seg
        m_h = jnp.concatenate(mh_cols, axis=1)         # (TC, H)
        a_h = jnp.concatenate(sh_cols, axis=1) * (1.0 / W)
        a_w = s_w * (1.0 / H)                          # (TC, W)

        # conv1 (1x1 over the [max, mean] stack) folded to 3 SMEM scalars.
        t_h = w0 * m_h + w1 * a_h + bc                 # (TC, H)
        t_w = w0 * m_w + w1 * a_w + bc                 # (TC, W)

        # conv2 tap vectors: broadcast once, shared by both paths (hoisted out
        # of the tap loops -- JAX does not CSE broadcast_in_dim).
        kw_h = [jnp.broadcast_to(kw[:, k:k + 1], (TC, LP_H))
                for k in range(KSIZE)]
        kw_w = kw_h if LP_W == LP_H else [
            jnp.broadcast_to(kw[:, k:k + 1], (TC, LP_W)) for k in range(KSIZE)]

        def attn_weight(t, L, LP, kw_b):
            # Depthwise 7-tap conv1d with zero padding, implemented as XLU
            # rolls of a zero-extended 128-lane-aligned slab: wrapped lanes
            # land in the zero pad, so no per-tap masks or unaligned slices.
            tp = jnp.concatenate(
                [t, jnp.zeros((TC, LP - L), jnp.float32)], axis=1)   # (TC, LP)
            acc = kw_b[PAD] * tp
            for k in range(KSIZE):
                if k == PAD:
                    continue
                s = PAD - k                       # want tp[i - s] at lane i
                acc = acc + kw_b[k] * pltpu.roll(
                    tp, (roll_sign * s) % LP, axis=1)
            # inference-mode BN (folded scale/shift) + sigmoid.
            return jax.nn.sigmoid(scale * acc[:, :L] + shift)        # (TC, L)

        wh = attn_weight(t_h, H, LP_H, kw_h)           # (TC, H)  h-path weight
        ww = attn_weight(t_w, W, LP_W, kw_w)           # (TC, W)  w-path weight

        # out = x + x_h + x_w = x * (1 + wh[h] + ww[w]); build the factor in
        # the flat layout so the final store is one dense lane-wide vst.
        f_w = jnp.concatenate([ww] * H, axis=1)        # (TC, HW): ww per h-seg
        f_h = jnp.concatenate(
            [jnp.broadcast_to(wh[:, h:h + 1], (TC, W)) for h in range(H)],
            axis=1)                                    # (TC, HW): wh repeated W
        out_ref[0] = (x2 * (1.0 + f_h + f_w)).astype(out_dtype)

    return iia_kernel


def iia_pallas(x, conv1_w, conv1_b, conv2_w, bn_gamma, bn_beta, bn_mean,
               bn_var, eps=1e-5):
    B, C, H, W = x.shape
    HW = H * W
    dt = x.dtype
    itemsize = jnp.dtype(dt).itemsize

    # Fold conv1 (1x1 over [max, mean]) into three scalars (held in SMEM).
    conv1_params = jnp.array(
        [conv1_w[0, 0, 0, 0], conv1_w[0, 1, 0, 0], conv1_b[0]],
        dtype=jnp.float32)
    # Fold BatchNorm1d (inference mode) into per-channel scale/shift.
    inv = bn_gamma / jnp.sqrt(bn_var + eps)
    scale = inv.reshape(C, 1).astype(jnp.float32)
    shift = (bn_beta - bn_mean * inv).reshape(C, 1).astype(jnp.float32)
    conv2_flat = conv2_w.reshape(C, KSIZE).astype(jnp.float32)

    # Lane-dense layout: flatten (H, W) -> H*W (free contiguous reshape).
    x_flat = x.reshape(B, C, HW)

    tc = _pick_channel_tile(C, HW, itemsize)
    n_ct = C // tc
    kernel = _make_iia_kernel(tc, H, W, _roll_sign(), dt)

    cost = pl.CostEstimate(
        flops=int(7 * B * C * HW + 2 * KSIZE * B * C * (H + W)),
        transcendentals=int(B * C * (H + W)),
        bytes_accessed=int(2 * B * C * HW * itemsize),
    )

    out_flat = pl.pallas_call(
        kernel,
        out_shape=jax.ShapeDtypeStruct((B, C, HW), dt),
        grid=(B, n_ct),
        in_specs=[
            pl.BlockSpec((1, tc, HW), lambda b, ci: (b, ci, 0)),
            pl.BlockSpec(memory_space=pltpu.MemorySpace.SMEM),
            pl.BlockSpec((tc, KSIZE), lambda b, ci: (ci, 0)),
            pl.BlockSpec((tc, 1), lambda b, ci: (ci, 0)),
            pl.BlockSpec((tc, 1), lambda b, ci: (ci, 0)),
        ],
        out_specs=pl.BlockSpec((1, tc, HW), lambda b, ci: (b, ci, 0)),
        compiler_params=pltpu.CompilerParams(
            dimension_semantics=("parallel", "parallel")),
        cost_estimate=cost,
    )(x_flat, conv1_params, conv2_flat, scale, shift)
    return out_flat.reshape(B, C, H, W)


def iia_reference(x, conv1_w, conv1_b, conv2_w, bn_gamma, bn_beta, bn_mean,
                  bn_var, eps=1e-5):
    """Pure-JAX reference mirroring the PyTorch forward (BN in eval mode)."""
    sc = bn_gamma / jnp.sqrt(bn_var + eps)
    sh = bn_beta - bn_mean * sc

    def attn(xp):  # xp: (b, d1, c, L), reduce over d1, conv along L
        m = jnp.max(xp, axis=1)
        a = jnp.mean(xp, axis=1)
        t = conv1_w[0, 0, 0, 0] * m + conv1_w[0, 1, 0, 0] * a + conv1_b[0]
        L = t.shape[-1]
        tp = jnp.pad(t, ((0, 0), (0, 0), (PAD, PAD)))
        acc = jnp.zeros_like(t)
        for k in range(KSIZE):
            acc = acc + conv2_w[:, 0, k][None, :, None] * tp[:, :, k:k + L]
        wgt = jax.nn.sigmoid(sc[None, :, None] * acc + sh[None, :, None])
        return xp * wgt[:, None, :, :]

    x_h = attn(jnp.transpose(x, (0, 3, 1, 2)))     # (b, W, C, H)
    x_h = jnp.transpose(x_h, (0, 2, 3, 1))         # (b, C, H, W)
    x_w = attn(jnp.transpose(x, (0, 2, 1, 3)))     # (b, H, C, W)
    x_w = jnp.transpose(x_w, (0, 2, 1, 3))         # (b, C, H, W)
    return x + x_h + x_w


if __name__ == "__main__":
    B, C, H, W = 2, 4, 16, 16
    key = jax.random.PRNGKey(0)
    k = jax.random.split(key, 8)

    x = jax.random.normal(k[0], (B, C, H, W), dtype=jnp.float32)

    # Deterministic parameter init (shapes from the module's __init__).
    conv1_w = 0.2 * jax.random.normal(k[1], (1, 2, 1, 1), dtype=jnp.float32)
    conv1_b = 0.1 * jax.random.normal(k[2], (1,), dtype=jnp.float32)
    conv2_w = 0.2 * jax.random.normal(k[3], (C, 1, KSIZE), dtype=jnp.float32)
    bn_gamma = 1.0 + 0.1 * jax.random.normal(k[4], (C,), dtype=jnp.float32)
    bn_beta = 0.1 * jax.random.normal(k[5], (C,), dtype=jnp.float32)
    bn_mean = 0.1 * jax.random.normal(k[6], (C,), dtype=jnp.float32)
    bn_var = 1.0 + 0.1 * jnp.abs(jax.random.normal(k[7], (C,),
                                                   dtype=jnp.float32))
    args = (conv1_w, conv1_b, conv2_w, bn_gamma, bn_beta, bn_mean, bn_var)

    # f32 I/O path.
    out = jax.block_until_ready(iia_pallas(x, *args))
    ref = jax.block_until_ready(iia_reference(x, *args))
    assert out.shape == (B, C, H, W) and out.dtype == x.dtype
    np.testing.assert_allclose(np.asarray(out), np.asarray(ref),
                               rtol=1e-5, atol=1e-5)

    # bf16 I/O path (HBM traffic in bf16, f32 compute in-register).
    x16 = x.astype(jnp.bfloat16)
    out16 = jax.block_until_ready(iia_pallas(x16, *args))
    ref16 = iia_reference(x16.astype(jnp.float32), *args)
    assert out16.dtype == jnp.bfloat16
    np.testing.assert_allclose(np.asarray(out16.astype(jnp.float32)),
                               np.asarray(ref16), rtol=3e-2, atol=3e-2)

    print("KERNEL_OK")
</pallas_src>

<mosaic_0001>
module attributes {stable_mosaic.version = 11 : i64} {
  func.func @_probe_roll_kernel(%arg0: memref<8x128xf32, #tpu.memory_space<vmem>>, %arg1: memref<8x128xf32, #tpu.memory_space<vmem>>) attributes {dimension_semantics = [], scalar_prefetch = 0 : i64, scratch_operands = 0 : i64, tpu.core_type = #tpu.core_type<tc>} {
    %c0 = arith.constant 0 : index
    %c0_0 = arith.constant 0 : index
    %0 = vector.load %arg0[%c0, %c0_0] : memref<8x128xf32, #tpu.memory_space<vmem>>, vector<8x128xf32>
    %c1_i32 = arith.constant 1 : i32
    %1 = tpu.dynamic_rotate %0 by %c1_i32 dim 1 : vector<8x128xf32>, i32 -> vector<8x128xf32>
    %c0_1 = arith.constant 0 : index
    %c0_2 = arith.constant 0 : index
    %2 = vector.load %arg1[%c0_1, %c0_2] : memref<8x128xf32, #tpu.memory_space<vmem>>, vector<8x128xf32>
    tpu.vector_store %arg1[%c0_1, %c0_2], %1 {strides = array<i32>} : memref<8x128xf32, #tpu.memory_space<vmem>>, vector<8x128xf32>,
    return
  }
}

</mosaic_0001>

<llo_original>
// kernel: tpu_custom_call.1
$region0: #{tpu_custom_call.1}
  #allocation0 [shape = 'u32[]', space=smem, size = 0x4, offset = 0x4, fixed_abs, tag = 'smem constant byte address 0x4 - core index']
  #allocation1 [shape = 'u32[72,128]{1,0:T(1,128)}', space=vmem, size = 0x9000, scoped, tag = 'internal scratch']
  %s0 = inlined_call_operand.hbm [shape: f32[8,128], index: 0, kind: input, shape index: {}]
  %s1 = inlined_call_operand.hbm [shape: f32[8,128], index: 1, kind: output, shape index: {}]
  %s2 = sld [smem:[#allocation0]]
  $region18: #{tpu_custom_call.1} parent=0
    _
  %s4 = ssub.s32 1, %s2
  %s5 = scalar_select 0, %s4, %s2
  $region1: #{tpu_custom_call.1} parent=0
    #allocation2 [shape = 'u8[4096]{0}', space=vmem, size = 0x1000, scoped, tag = 'input window, operand 0, single buffered']
    #allocation3 [shape = 's32[1]{0}', space=sflag, size = 0x4, scoped, tag = 'scoped memory for tpu_custom_call.1']
    #allocation4 [shape = 's32[1]{0}', space=sflag, size = 0x4, scoped, tag = 'scoped memory for tpu_custom_call.1']
    #allocation5 [shape = 'u8[4096]{0}', space=vmem, size = 0x1000, scoped, tag = 'output window, operand 0, single buffered']
    %6 = vsyncpa [#allocation3], 0
    %7 = vsyncpa [#allocation4], 0
    // Predicated region
    $region2: #{tpu_custom_call.1} parent=1 // pred_check
      _
    $region3: #{tpu_custom_call.1} parent=1 // pred_check_branch
      %9 = sbr.rel (0) target = $region5
    $region4: #{tpu_custom_call.1} parent=1 // pred_region
      %11 = vsyncadd [#allocation3], 0
      %s13 = sshll.u32 %s0, 4
      %s14 = int_to_ptr.hbm [resolvable:$true] %s13
      %s15 = sshll.u32 [#allocation2], 4
      %s16 = int_to_ptr.vmem [resolvable:$true] %s15
      %18 = dma.hbm_to_vmem [thread:$0]  %s14, 128, %s16, [#allocation3]
    $region5: #{tpu_custom_call.1} parent=1 // pred_fallthru
      _
    // Predicated region
    $region6: #{tpu_custom_call.1} parent=1 // pred_check
      _
    $region7: #{tpu_custom_call.1} parent=1 // pred_check_branch
      %20 = sbr.rel (0) target = $region9
    $region8: #{tpu_custom_call.1} parent=1 // pred_region
      %22 = dma.done [#allocation3], 128
    $region9: #{tpu_custom_call.1} parent=1 // pred_fallthru
      _
    %v23 = vld [vmem:[#allocation2] sm:$0xff]
    %24 = vrot.lane.b32.xlu0 %v23, 1
    %v25 = vpop.permute.xlu0 %24
    %26 = vst [vmem:[#allocation5] sm:$0xff] %v25
    // Predicated region
    $region10: #{tpu_custom_call.1} parent=1 // pred_check
      _
    $region11: #{tpu_custom_call.1} parent=1 // pred_check_branch
      %28 = sbr.rel (0) target = $region13
    $region12: #{tpu_custom_call.1} parent=1 // pred_region
      %30 = vsyncadd [#allocation4], 0
      %s32 = sshll.u32 [#allocation5], 4
      %s33 = int_to_ptr.vmem [resolvable:$true] %s32
      %s34 = sshll.u32 %s1, 4
      %s35 = int_to_ptr.hbm [resolvable:$true] %s34
      %37 = dma.vmem_to_hbm [thread:$0]  %s33, 128, %s35, [#allocation4]
    $region13: #{tpu_custom_call.1} parent=1 // pred_fallthru
      _
    // Predicated region
    $region14: #{tpu_custom_call.1} parent=1 // pred_check
      _
    $region15: #{tpu_custom_call.1} parent=1 // pred_check_branch
      %39 = sbr.rel (0) target = $region17
    $region16: #{tpu_custom_call.1} parent=1 // pred_region
      %41 = dma.done [#allocation4], 128
    $region17: #{tpu_custom_call.1} parent=1 // pred_fallthru
      _
    %42 = vsyncpa [#allocation3], 1
    %43 = vsyncpa [#allocation4], 1

</llo_original>
